<compile_context>
chip_gen: v7x
topology: tpu7x:2x2x1
jax: 0.10.0
libtpu: 0.0.40
codegen_flags: <defaults>
</compile_context>

<pallas_src>
import functools

import jax
import jax.numpy as jnp
from jax import lax
from jax.experimental import pallas as pl
from jax.experimental.pallas import tpu as pltpu

# Deterministic "rescale_with_baseline=True" baseline for the F1 score.
F1_BASELINE = 0.83
_EPS = 1e-12


def _bertscore_kernel(hyp_ref, ref_ref, out_ref, inv_h_scr, inv_r_scr, *, tb):
    """Rescaled BERTScore F1 for one batch tile of `tb` (hyp, ref) pairs.

    hyp_ref:   (tb, Lh, D) bf16 hypothesis token embeddings (un-normalized)
    ref_ref:   (tb, Lr, D) bf16 reference  token embeddings (un-normalized)
    out_ref:   (tb, 128)   f32 F1 broadcast along the lane dim (wrapper takes [:, 0])
    inv_h_scr: (tb, Lh, 1) f32 scratch -- per-hyp-token inverse L2 norms (rows)
    inv_r_scr: (tb, 1, Lr) f32 scratch -- per-ref-token inverse L2 norms (lanes)
    """
    d = hyp_ref.shape[-1]

    # ---- Hoisted per-token inverse L2 norms for the whole tile --------------
    # Square in bf16 on the VPU, accumulate the sum-of-squares in f32 on the
    # MXU via batched dots against a ones vector: no full-tile f32 temporaries,
    # and the results come out directly in the orientation needed below.
    h_all = hyp_ref[...]                       # (tb, Lh, D) bf16
    r_all = ref_ref[...]                       # (tb, Lr, D) bf16
    hsq = h_all * h_all                        # bf16
    rsq = r_all * r_all                        # bf16
    ones_v = jnp.ones((tb, 1, d), jnp.bfloat16)

    ssq_h = lax.dot_general(                   # (tb, Lh, 1) f32, row-oriented
        hsq, ones_v,
        dimension_numbers=(((2,), (2,)), ((0,), (0,))),
        preferred_element_type=jnp.float32)
    ssq_r = lax.dot_general(                   # (tb, 1, Lr) f32, lane-oriented
        ones_v, rsq,
        dimension_numbers=(((2,), (2,)), ((0,), (0,))),
        preferred_element_type=jnp.float32)

    inv_h_scr[...] = lax.rsqrt(ssq_h + _EPS)
    inv_r_scr[...] = lax.rsqrt(ssq_r + _EPS)

    # ---- Per-example greedy matching (fori_loop bounds live ranges) ---------
    row_ids = lax.broadcasted_iota(jnp.int32, out_ref.shape, 0)   # (tb, 128)

    def body(b, acc):
        h = hyp_ref[b]                         # (Lh, D) bf16
        r = ref_ref[b]                         # (Lr, D) bf16

        # Raw bf16 dot on the MXU with f32 accumulation; cosine similarity is
        # recovered by rescaling with the per-token inverse norms afterwards.
        sim = lax.dot_general(
            h, r,
            dimension_numbers=(((1,), (1,)), ((), ())),
            preferred_element_type=jnp.float32)            # (Lh, Lr) f32
        sim = sim * inv_h_scr[b] * inv_r_scr[b]             # (Lh,1) * (1,Lr)

        # Greedy matching (idf=False -> plain means):
        #   precision: for each hyp token, best matching ref token
        #   recall:    for each ref token, best matching hyp token
        precision = jnp.mean(jnp.max(sim, axis=1, keepdims=True),
                             axis=0, keepdims=True)         # (1, 1)
        recall = jnp.mean(jnp.max(sim, axis=0, keepdims=True),
                          axis=1, keepdims=True)            # (1, 1)

        # Exact division: the baseline rescale amplifies any approx error and
        # this is a single scalar per example.
        f1 = 2.0 * precision * recall / (precision + recall + _EPS)

        # rescale_with_baseline=True
        f1 = (f1 - F1_BASELINE) * (1.0 / (1.0 - F1_BASELINE))

        return jnp.where(row_ids == b, f1, acc)

    out_ref[...] = lax.fori_loop(
        0, tb, body, jnp.zeros(out_ref.shape, jnp.float32))


def _tile_and_vmem_limit(batch):
    """Per-generation batch tile and VMEM budget (gated on get_tpu_info)."""
    vmem_cap = 64 * 1024 * 1024          # conservative default (v7x per-TC)
    try:
        cap = getattr(pltpu.get_tpu_info(), "vmem_capacity_bytes", None)
        if cap:
            vmem_cap = int(cap)
    except Exception:
        pass

    if vmem_cap >= 96 * 1024 * 1024:     # v5e / v6e: 128 MiB physical VMEM
        tb, limit = 16, 96 * 1024 * 1024
    else:                                # v7x: 64 MiB per TensorCore
        tb, limit = 8, 48 * 1024 * 1024

    # Keep at least 2 grid steps when the batch allows it (so the "parallel"
    # batch axis can feed both TensorCores on v7x); keep tb sublane-aligned.
    while tb > 8 and ((batch + tb - 1) // tb) < 2:
        tb //= 2
    return tb, limit


def bert_score_f1(hyp_emb, ref_emb):
    """Returns (mean_f1 scalar, rescaled F1 per example of shape (B,))."""
    B, Lh, D = hyp_emb.shape
    _, Lr, _ = ref_emb.shape

    tb, vmem_limit = _tile_and_vmem_limit(B)

    # bf16 MXU feed (half the HBM->VMEM bytes). No-op when the encoder already
    # produced bf16 embeddings (as in the demo below).
    hyp = hyp_emb.astype(jnp.bfloat16)
    ref = ref_emb.astype(jnp.bfloat16)

    # Pad ONLY the batch axis (no full zeros+set materialization) so each grid
    # step owns a sublane-aligned (tb, 128) output block. Padded rows produce a
    # finite garbage F1 and are sliced off below.
    b_pad = ((B + tb - 1) // tb) * tb
    if b_pad != B:
        hyp = jnp.pad(hyp, ((0, b_pad - B), (0, 0), (0, 0)))
        ref = jnp.pad(ref, ((0, b_pad - B), (0, 0), (0, 0)))

    out = pl.pallas_call(
        functools.partial(_bertscore_kernel, tb=tb),
        out_shape=jax.ShapeDtypeStruct((b_pad, 128), jnp.float32),
        grid=(b_pad // tb,),
        in_specs=[
            pl.BlockSpec((tb, Lh, D), lambda i: (i, 0, 0)),
            pl.BlockSpec((tb, Lr, D), lambda i: (i, 0, 0)),
        ],
        out_specs=pl.BlockSpec((tb, 128), lambda i: (i, 0)),
        scratch_shapes=[
            pltpu.VMEM((tb, Lh, 1), jnp.float32),   # hyp inverse norms (rows)
            pltpu.VMEM((tb, 1, Lr), jnp.float32),   # ref inverse norms (lanes)
        ],
        compiler_params=pltpu.CompilerParams(
            dimension_semantics=("parallel",),      # megacore-shard batch tiles
            vmem_limit_bytes=vmem_limit,
        ),
    )(hyp, ref)

    f1 = out[:B, 0]
    return jnp.mean(f1), f1


def _bert_score_f1_reference(hyp_emb, ref_emb):
    """Pure-JAX f32 reference of the same matching math (for validation)."""
    h = hyp_emb.astype(jnp.float32)
    r = ref_emb.astype(jnp.float32)
    h = h / jnp.sqrt(jnp.sum(h * h, axis=-1, keepdims=True) + _EPS)
    r = r / jnp.sqrt(jnp.sum(r * r, axis=-1, keepdims=True) + _EPS)
    sim = jnp.einsum("bld,bmd->blm", h, r)
    precision = jnp.mean(jnp.max(sim, axis=2), axis=1)
    recall = jnp.mean(jnp.max(sim, axis=1), axis=1)
    f1 = 2.0 * precision * recall / (precision + recall + _EPS)
    return (f1 - F1_BASELINE) / (1.0 - F1_BASELINE)


if __name__ == "__main__":
    # Small, deterministic synthetic setup consistent with the forward
    # semantics: batch of 2 (hyp, ref) sentence pairs, seq length 8, hidden 32.
    B, L, D, VOCAB = 2, 8, 32, 100

    key = jax.random.PRNGKey(0)
    k_emb, k_ref, k_hyp = jax.random.split(key, 3)

    # Deterministic "model parameters": a bf16 token embedding table -- the
    # bf16 cast is fused "upstream" so the wrapper adds no extra HBM copy.
    emb_table = jax.random.normal(k_emb, (VOCAB, D), dtype=jnp.bfloat16)

    # Deterministic "tokenized" refs / hyps.
    ref_ids = jax.random.randint(k_ref, (B, L), 0, VOCAB)
    hyp_ids = jax.random.randint(k_hyp, (B, L), 0, VOCAB)

    ref_emb = emb_table[ref_ids]  # (B, L, D) bf16
    hyp_emb = emb_table[hyp_ids]  # (B, L, D) bf16

    mean_f1, f1 = bert_score_f1(hyp_emb, ref_emb)
    jax.block_until_ready((mean_f1, f1))

    # Validate against a pure-JAX f32 reference (bf16 norm error ~0.4% max,
    # amplified ~5.9x by the baseline rescale -> loose tolerance).
    f1_ref = _bert_score_f1_reference(hyp_emb, ref_emb)
    assert bool(jnp.allclose(f1, f1_ref, atol=5e-2)), (f1, f1_ref)

    # Mirror the PyTorch return structure: (float, list)
    result = (float(mean_f1), [float(x) for x in f1])
    assert len(result[1]) == B

    print("KERNEL_OK")
</pallas_src>

<mosaic_0001>
module attributes {stable_mosaic.version = 11 : i64} {
  func.func @_bertscore_kernel(%arg0: i32, %arg1: memref<8x8x32xbf16, #tpu.memory_space<vmem>>, %arg2: memref<8x8x32xbf16, #tpu.memory_space<vmem>>, %arg3: memref<8x128xf32, #tpu.memory_space<vmem>>, %arg4: memref<8x8x1xf32, #tpu.memory_space<vmem>>, %arg5: memref<8x1x8xf32, #tpu.memory_space<vmem>>) attributes {dimension_semantics = [#tpu.dimension_semantics<parallel>], iteration_bounds = array<i64: 1>, scalar_prefetch = 0 : i64, scratch_operands = 2 : i64, tpu.core_type = #tpu.core_type<tc>, window_params = [{transform_indices = @transform_0, window_bounds = array<i64: 8, 8, 32>}, {transform_indices = @transform_1, window_bounds = array<i64: 8, 8, 32>}, {transform_indices = @transform_2, window_bounds = array<i64: 8, 128>}]} {
    %c0 = arith.constant 0 : index
    %c0_0 = arith.constant 0 : index
    %c0_1 = arith.constant 0 : index
    %0 = vector.load %arg1[%c0, %c0_0, %c0_1] : memref<8x8x32xbf16, #tpu.memory_space<vmem>>, vector<8x8x32xbf16>
    %c0_2 = arith.constant 0 : index
    %c0_3 = arith.constant 0 : index
    %c0_4 = arith.constant 0 : index
    %1 = vector.load %arg2[%c0_2, %c0_3, %c0_4] : memref<8x8x32xbf16, #tpu.memory_space<vmem>>, vector<8x8x32xbf16>
    %2 = arith.mulf %0, %0 : vector<8x8x32xbf16>
    %3 = arith.mulf %1, %1 : vector<8x8x32xbf16>
    %cst = arith.constant 1.000000e+00 : bf16
    %4 = vector.broadcast %cst : bf16 to vector<8x1x32xbf16>
    %cst_5 = arith.constant dense<0.000000e+00> : vector<8x8x1xf32>
    %5 = tpu.matmul %2, %4, %cst_5 {dimension_numbers = #tpu.dot_dimension_numbers<[2], [2], [1], [1], [0, 0, 0, 1, 1, 1], [0], [0]>} : vector<8x8x32xbf16>, vector<8x1x32xbf16>, vector<8x8x1xf32> -> vector<8x8x1xf32>
    %cst_6 = arith.constant dense<0.000000e+00> : vector<8x1x8xf32>
    %6 = tpu.matmul %4, %3, %cst_6 {dimension_numbers = #tpu.dot_dimension_numbers<[2], [2], [1], [1], [0, 0, 0, 1, 1, 1], [0], [0]>} : vector<8x1x32xbf16>, vector<8x8x32xbf16>, vector<8x1x8xf32> -> vector<8x1x8xf32>
    %cst_7 = arith.constant 9.99999996E-13 : f32
    %7 = vector.broadcast %cst_7 : f32 to vector<8x8x1xf32>
    %8 = arith.addf %5, %7 : vector<8x8x1xf32>
    %9 = math.rsqrt %8 : vector<8x8x1xf32>
    %c0_8 = arith.constant 0 : index
    %c0_9 = arith.constant 0 : index
    %c0_10 = arith.constant 0 : index
    %10 = vector.load %arg4[%c0_8, %c0_9, %c0_10] : memref<8x8x1xf32, #tpu.memory_space<vmem>>, vector<8x8x1xf32>
    tpu.vector_store %arg4[%c0_8, %c0_9, %c0_10], %9 {strides = array<i32>} : memref<8x8x1xf32, #tpu.memory_space<vmem>>, vector<8x8x1xf32>,
    %cst_11 = arith.constant 9.99999996E-13 : f32
    %11 = vector.broadcast %cst_11 : f32 to vector<8x1x8xf32>
    %12 = arith.addf %6, %11 : vector<8x1x8xf32>
    %13 = math.rsqrt %12 : vector<8x1x8xf32>
    %c0_12 = arith.constant 0 : index
    %c0_13 = arith.constant 0 : index
    %c0_14 = arith.constant 0 : index
    %14 = vector.load %arg5[%c0_12, %c0_13, %c0_14] : memref<8x1x8xf32, #tpu.memory_space<vmem>>, vector<8x1x8xf32>
    tpu.vector_store %arg5[%c0_12, %c0_13, %c0_14], %13 {strides = array<i32>} : memref<8x1x8xf32, #tpu.memory_space<vmem>>, vector<8x1x8xf32>,
    %15 = tpu.iota {dimensions = array<i32: 0>} : vector<8x128xi32>
    %cst_15 = arith.constant 0.000000e+00 : f32
    %16 = vector.broadcast %cst_15 : f32 to vector<8x128xf32>
    %c0_i32 = arith.constant 0 : i32
    %c8_i32 = arith.constant 8 : i32
    %17 = arith.addi %c0_i32, %c8_i32 : i32
    %c1_i32 = arith.constant 1 : i32
    %18 = scf.for %arg6 = %c0_i32 to %17 step %c1_i32 iter_args(%arg7 = %16) -> (vector<8x128xf32>)  : i32 {
      %20 = arith.index_cast %arg6 : i32 to index
      %c0_19 = arith.constant 0 : index
      %c0_20 = arith.constant 0 : index
      %21 = vector.load %arg1[%20, %c0_19, %c0_20] : memref<8x8x32xbf16, #tpu.memory_space<vmem>>, vector<1x8x32xbf16>
      %22 = vector.shape_cast %21 : vector<1x8x32xbf16> to vector<8x32xbf16>
      %23 = arith.index_cast %arg6 : i32 to index
      %c0_21 = arith.constant 0 : index
      %c0_22 = arith.constant 0 : index
      %24 = vector.load %arg2[%23, %c0_21, %c0_22] : memref<8x8x32xbf16, #tpu.memory_space<vmem>>, vector<1x8x32xbf16>
      %25 = vector.shape_cast %24 : vector<1x8x32xbf16> to vector<8x32xbf16>
      %cst_23 = arith.constant dense<0.000000e+00> : vector<8x8xf32>
      %26 = tpu.matmul %22, %25, %cst_23 {dimension_numbers = #tpu.dot_dimension_numbers<[1], [1], [0], [0], [0, 0, 1, 0], [], []>} : vector<8x32xbf16>, vector<8x32xbf16>, vector<8x8xf32> -> vector<8x8xf32>
      %27 = arith.index_cast %arg6 : i32 to index
      %c0_24 = arith.constant 0 : index
      %c0_25 = arith.constant 0 : index
      %28 = vector.load %arg4[%27, %c0_24, %c0_25] : memref<8x8x1xf32, #tpu.memory_space<vmem>>, vector<1x8x1xf32>
      %29 = vector.shape_cast %28 : vector<1x8x1xf32> to vector<8x1xf32>
      %30 = vector.broadcast %29 : vector<8x1xf32> to vector<8x8xf32>
      %31 = arith.mulf %26, %30 : vector<8x8xf32>
      %32 = arith.index_cast %arg6 : i32 to index
      %c0_26 = arith.constant 0 : index
      %c0_27 = arith.constant 0 : index
      %33 = vector.load %arg5[%32, %c0_26, %c0_27] : memref<8x1x8xf32, #tpu.memory_space<vmem>>, vector<1x1x8xf32>
      %34 = vector.shape_cast %33 : vector<1x1x8xf32> to vector<1x8xf32>
      %35 = vector.broadcast %34 : vector<1x8xf32> to vector<8x8xf32>
      %36 = arith.mulf %31, %35 : vector<8x8xf32>
      %cst_28 = arith.constant dense<0xFF800000> : vector<8xf32>
      %37 = vector.multi_reduction <maximumf>, %36, %cst_28 [1] : vector<8x8xf32> to vector<8xf32>
      %38 = vector.shape_cast %37 : vector<8xf32> to vector<8x1xf32>
      %cst_29 = arith.constant dense<0.000000e+00> : vector<1xf32>
      %39 = vector.multi_reduction <add>, %38, %cst_29 [0] : vector<8x1xf32> to vector<1xf32>
      %40 = vector.shape_cast %39 : vector<1xf32> to vector<1x1xf32>
      %cst_30 = arith.constant 8.000000e+00 : f32
      %41 = vector.broadcast %cst_30 : f32 to vector<1x1xf32>
      %42 = arith.divf %40, %41 : vector<1x1xf32>
      %cst_31 = arith.constant dense<0xFF800000> : vector<8xf32>
      %43 = vector.multi_reduction <maximumf>, %36, %cst_31 [0] : vector<8x8xf32> to vector<8xf32>
      %44 = vector.shape_cast %43 : vector<8xf32> to vector<1x8xf32>
      %cst_32 = arith.constant dense<0.000000e+00> : vector<1xf32>
      %45 = vector.multi_reduction <add>, %44, %cst_32 [1] : vector<1x8xf32> to vector<1xf32>
      %46 = vector.shape_cast %45 : vector<1xf32> to vector<1x1xf32>
      %cst_33 = arith.constant 8.000000e+00 : f32
      %47 = vector.broadcast %cst_33 : f32 to vector<1x1xf32>
      %48 = arith.divf %46, %47 : vector<1x1xf32>
      %cst_34 = arith.constant 2.000000e+00 : f32
      %49 = vector.broadcast %cst_34 : f32 to vector<1x1xf32>
      %50 = arith.mulf %49, %42 : vector<1x1xf32>
      %51 = arith.mulf %50, %48 : vector<1x1xf32>
      %52 = arith.addf %42, %48 : vector<1x1xf32>
      %cst_35 = arith.constant 9.99999996E-13 : f32
      %53 = vector.broadcast %cst_35 : f32 to vector<1x1xf32>
      %54 = arith.addf %52, %53 : vector<1x1xf32>
      %55 = arith.divf %51, %54 : vector<1x1xf32>
      %cst_36 = arith.constant 0.829999983 : f32
      %56 = vector.broadcast %cst_36 : f32 to vector<1x1xf32>
      %57 = arith.subf %55, %56 : vector<1x1xf32>
      %cst_37 = arith.constant 5.88235283 : f32
      %58 = vector.broadcast %cst_37 : f32 to vector<1x1xf32>
      %59 = arith.mulf %57, %58 : vector<1x1xf32>
      %60 = vector.broadcast %arg6 : i32 to vector<8x128xi32>
      %61 = arith.cmpi eq, %15, %60 : vector<8x128xi32>
      %62 = vector.shape_cast %59 : vector<1x1xf32> to vector<1x1xf32>
      %63 = vector.broadcast %62 : vector<1x1xf32> to vector<8x128xf32>
      %64 = arith.select %61, %63, %arg7 : vector<8x128xi1>, vector<8x128xf32>
      scf.yield %64 : vector<8x128xf32>
    }
    %c8_i32_16 = arith.constant 8 : i32
    %c0_17 = arith.constant 0 : index
    %c0_18 = arith.constant 0 : index
    %19 = vector.load %arg3[%c0_17, %c0_18] : memref<8x128xf32, #tpu.memory_space<vmem>>, vector<8x128xf32>
    tpu.vector_store %arg3[%c0_17, %c0_18], %18 {strides = array<i32>} : memref<8x128xf32, #tpu.memory_space<vmem>>, vector<8x128xf32>,
    return
  }
  func.func @transform_0(%arg0: i32) -> (i32, i32, i32) {
    %c0_i32 = arith.constant 0 : i32
    %c0_i32_0 = arith.constant 0 : i32
    %c0_i32_1 = arith.constant 0 : i32
    return %arg0, %c0_i32, %c0_i32_0 : i32, i32, i32
  }
  func.func @transform_1(%arg0: i32) -> (i32, i32, i32) {
    %c0_i32 = arith.constant 0 : i32
    %c0_i32_0 = arith.constant 0 : i32
    %c0_i32_1 = arith.constant 0 : i32
    return %arg0, %c0_i32, %c0_i32_0 : i32, i32, i32
  }
  func.func @transform_2(%arg0: i32) -> (i32, i32) {
    %c0_i32 = arith.constant 0 : i32
    %c0_i32_0 = arith.constant 0 : i32
    return %arg0, %c0_i32 : i32, i32
  }
}

</mosaic_0001>

<llo_original>
// kernel: tpu_custom_call.1
$region0: #{tpu_custom_call.1}
  #allocation0 [shape = 'u32[]', space=smem, size = 0x4, offset = 0x4, fixed_abs, tag = 'smem constant byte address 0x4 - core index']
  #allocation1 [shape = 'u32[144,128]{1,0:T(1,128)}', space=vmem, size = 0x12000, scoped, tag = 'internal scratch']
  #allocation2 [shape = 'f32[8,8,1]{2,1,0:T(8,128)}', space=vmem, size = 0x8000, scoped, tag = 'scratch operand']
  #allocation3 [shape = 'f32[8,1,8]{2,1,0:T(1,128)}', space=vmem, size = 0x1000, scoped, tag = 'scratch operand']
  %s0 = inlined_call_operand.hbm [shape: bf16[8,8,32], index: 0, kind: input, shape index: {}]
  %s1 = inlined_call_operand.hbm [shape: bf16[8,8,32], index: 1, kind: input, shape index: {}]
  %s2 = inlined_call_operand.hbm [shape: f32[8,128], index: 2, kind: output, shape index: {}]
  %s3 = sld [smem:[#allocation0]]
  $region33: #{tpu_custom_call.1} parent=0
    _
  %s5 = ssub.s32 1, %s3
  %s6 = scalar_select 0, %s5, %s3
  $region1: #{tpu_custom_call.1} parent=0
    #allocation4 [shape = 'u8[16384]{0}', space=vmem, size = 0x4000, scoped, tag = 'input window, operand 0, single buffered']
    #allocation5 [shape = 's32[1]{0}', space=sflag, size = 0x4, scoped, tag = 'scoped memory for tpu_custom_call.1']
    #allocation6 [shape = 's32[1]{0}', space=sflag, size = 0x4, scoped, tag = 'scoped memory for tpu_custom_call.1']
    #allocation7 [shape = 'u8[16384]{0}', space=vmem, size = 0x4000, scoped, tag = 'input window, operand 1, single buffered']
    #allocation8 [shape = 's32[1]{0}', space=sflag, size = 0x4, scoped, tag = 'scoped memory for tpu_custom_call.1']
    #allocation9 [shape = 'u8[4096]{0}', space=vmem, size = 0x1000, scoped, tag = 'output window, operand 0, single buffered']
    %7 = vsyncpa [#allocation5], 0
    %8 = vsyncpa [#allocation8], 0
    %9 = vsyncpa [#allocation6], 0
    // Predicated region
    $region2: #{tpu_custom_call.1} parent=1 // pred_check
      _
    $region3: #{tpu_custom_call.1} parent=1 // pred_check_branch
      %11 = sbr.rel (0) target = $region5
    $region4: #{tpu_custom_call.1} parent=1 // pred_region
      %s13 = ssub.s32 512, 512
      %14 = vsyncadd [#allocation5], %s13
      %s15 = sshll.u32 [#allocation4], 4
      %s16 = int_to_ptr.vmem [resolvable:$true] %s15
      %21 = dma.hbm_to_vmem [thread:$0]  %s0, 512, %s16, [#allocation5], 64, 64, 4
    $region5: #{tpu_custom_call.1} parent=1 // pred_fallthru
      _
    // Predicated region
    $region6: #{tpu_custom_call.1} parent=1 // pred_check
      _
    $region7: #{tpu_custom_call.1} parent=1 // pred_check_branch
      %23 = sbr.rel (0) target = $region9
    $region8: #{tpu_custom_call.1} parent=1 // pred_region
      %s25 = ssub.s32 512, 512
      %26 = vsyncadd [#allocation8], %s25
      %s27 = sshll.u32 [#allocation7], 4
      %s28 = int_to_ptr.vmem [resolvable:$true] %s27
      %33 = dma.hbm_to_vmem [thread:$0]  %s1, 512, %s28, [#allocation8], 64, 64, 4
    $region9: #{tpu_custom_call.1} parent=1 // pred_fallthru
      _
    // Predicated region
    $region10: #{tpu_custom_call.1} parent=1 // pred_check
      _
    $region11: #{tpu_custom_call.1} parent=1 // pred_check_branch
      %35 = sbr.rel (0) target = $region13
    $region12: #{tpu_custom_call.1} parent=1 // pred_region
      %36 = dma.done [#allocation5], 512
    $region13: #{tpu_custom_call.1} parent=1 // pred_fallthru
      _
    // Predicated region
    $region14: #{tpu_custom_call.1} parent=1 // pred_check
      _
    $region15: #{tpu_custom_call.1} parent=1 // pred_check_branch
      %38 = sbr.rel (0) target = $region17
    $region16: #{tpu_custom_call.1} parent=1 // pred_region
      %39 = dma.done [#allocation8], 512
    $region17: #{tpu_custom_call.1} parent=1 // pred_fallthru
      _
    %v42 = vld [vmem:[#allocation4] sm:$0xf]
    %v43 = vld [vmem:[#allocation4 + $0x4] sm:$0xf]
    %v44 = vld [vmem:[#allocation4 + $0x8] sm:$0xf]
    %v45 = vld [vmem:[#allocation4 + $0xc] sm:$0xf]
    %v46 = vld [vmem:[#allocation4 + $0x10] sm:$0xf]
    %v47 = vld [vmem:[#allocation4 + $0x14] sm:$0xf]
    %v48 = vld [vmem:[#allocation4 + $0x18] sm:$0xf]
    %v49 = vld [vmem:[#allocation4 + $0x1c] sm:$0xf]
    %v50 = vld [vmem:[#allocation7] sm:$0xf]
    %v51 = vld [vmem:[#allocation7 + $0x4] sm:$0xf]
    %v52 = vld [vmem:[#allocation7 + $0x8] sm:$0xf]
    %v53 = vld [vmem:[#allocation7 + $0xc] sm:$0xf]
    %v54 = vld [vmem:[#allocation7 + $0x10] sm:$0xf]
    %v55 = vld [vmem:[#allocation7 + $0x14] sm:$0xf]
    %v56 = vld [vmem:[#allocation7 + $0x18] sm:$0xf]
    %v57 = vld [vmem:[#allocation7 + $0x1c] sm:$0xf]
    %v58 = vmul.bf16 %v42, %v42
    %v59 = vmul.bf16 %v43, %v43
    %v60 = vmul.bf16 %v44, %v44
    %v61 = vmul.bf16 %v45, %v45
    %v62 = vmul.bf16 %v46, %v46
    %v63 = vmul.bf16 %v47, %v47
    %v64 = vmul.bf16 %v48, %v48
    %v65 = vmul.bf16 %v49, %v49
    %v66 = vmul.bf16 %v50, %v50
    %v67 = vmul.bf16 %v51, %v51
    %v68 = vmul.bf16 %v52, %v52
    %v69 = vmul.bf16 %v53, %v53
    %v70 = vmul.bf16 %v54, %v54
    %v71 = vmul.bf16 %v55, %v55
    %v72 = vmul.bf16 %v56, %v56
    %v73 = vmul.bf16 %v57, %v57
    %vm74 = vcmask 261120
    %v76 = vsel %vm74, %v58, 0
    %v79 = vsel %vm74, 1065369472, 0
    %81 = vmatprep.subr.bf16.mxu0 0
    %82 = vmatpush1.bf16.xpose.msra.mxu0 %v79
    %83 = vmatprep.subr.bf16.mxu0 0
    %84 = vmatpush1.bf16.xpose.msra.mxu0 0
    %85 = vmatprep.subr.bf16.mxu0 0
    %86 = vmatpush1.bf16.xpose.msra.mxu0 0
    %87 = vmatprep.subr.bf16.mxu0 0
    %88 = vmatpush1.bf16.xpose.msra.mxu0 0
    %89 = vmatprep.subr.bf16.mxu0 0
    %90 = vmatpush1.bf16.xpose.msra.mxu0 0
    %91 = vmatprep.subr.bf16.mxu0 0
    %92 = vmatpush1.bf16.xpose.msra.mxu0 0
    %93 = vmatprep.subr.bf16.mxu0 0
    %94 = vmatpush1.bf16.xpose.msra.mxu0 0
    %95 = vmatprep.subr.bf16.mxu0 0
    %96 = vmatpush1.bf16.xpose.msra.mxu0 0
    %97 = vmatprep.subr.bf16.mxu0 0
    %98 = vmatpush1.bf16.xpose.msra.mxu0 0
    %99 = vmatprep.subr.bf16.mxu0 0
    %100 = vmatpush1.bf16.xpose.msra.mxu0 0
    %101 = vmatprep.subr.bf16.mxu0 0
    %102 = vmatpush1.bf16.xpose.msra.mxu0 0
    %103 = vmatprep.subr.bf16.mxu0 0
    %104 = vmatpush1.bf16.xpose.msra.mxu0 0
    %105 = vmatprep.subr.bf16.mxu0 0
    %106 = vmatpush1.bf16.xpose.msra.mxu0 0
    %107 = vmatprep.subr.bf16.mxu0 0
    %108 = vmatpush1.bf16.xpose.msra.mxu0 0
    %109 = vmatprep.subr.bf16.mxu0 0
    %110 = vmatpush1.bf16.xpose.msra.mxu0 0
    %111 = vmatprep.subr.bf16.mxu0 0
    %112 = vmatpush1.bf16.xpose.msra.mxu0 0
    %113 = vmatprep.mubr.bf16.mxu0 0
    %114 = vmatmul.mubr.bf16.gmra.mrb[0].mxu0 %v76
    %v115 = vpop.f32.mrb[0].mxu0
    %v116 = vadd.f32 1e-12, %v115
    %v117 = vpop.f32.mrb[0].mxu0
    %v118 = vpop.f32.mrb[0].mxu0
    %v119 = vpop.f32.mrb[0].mxu0
    %120 = vdwg.mxu0
    %v122 = vsel %vm74, %v59, 0
    %124 = vmatprep.subr.bf16.mxu0 0
    %125 = vmatpush1.bf16.xpose.msra.mxu0 %v79
    %126 = vmatprep.subr.bf16.mxu0 0
    %127 = vmatpush1.bf16.xpose.msra.mxu0 0
    %128 = vmatprep.subr.bf16.mxu0 0
    %129 = vmatpush1.bf16.xpose.msra.mxu0 0
    %130 = vmatprep.subr.bf16.mxu0 0
    %131 = vmatpush1.bf16.xpose.msra.mxu0 0
    %132 = vmatprep.subr.bf16.mxu0 0
    %133 = vmatpush1.bf16.xpose.msra.mxu0 0
    %134 = vmatprep.subr.bf16.mxu0 0
    %135 = vmatpush1.bf16.xpose.msra.mxu0 0
    %136 = vmatprep.subr.bf16.mxu0 0
    %137 = vmatpush1.bf16.xpose.msra.mxu0 0
    %138 = vmatprep.subr.bf16.mxu0 0
    %139 = vmatpush1.bf16.xpose.msra.mxu0 0
    %140 = vmatprep.subr.bf16.mxu0 0
    %141 = vmatpush1.bf16.xpose.msra.mxu0 0
    %142 = vmatprep.subr.bf16.mxu0 0
    %143 = vmatpush1.bf16.xpose.msra.mxu0 0
    %144 = vmatprep.subr.bf16.mxu0 0
    %145 = vmatpush1.bf16.xpose.msra.mxu0 0
    %146 = vmatprep.subr.bf16.mxu0 0
    %147 = vmatpush1.bf16.xpose.msra.mxu0 0
    %148 = vmatprep.subr.bf16.mxu0 0
    %149 = vmatpush1.bf16.xpose.msra.mxu0 0
    %150 = vmatprep.subr.bf16.mxu0 0
    %151 = vmatpush1.bf16.xpose.msra.mxu0 0
    %152 = vmatprep.subr.bf16.mxu0 0
    %153 = vmatpush1.bf16.xpose.msra.mxu0 0
    %154 = vmatprep.subr.bf16.mxu0 0
    %155 = vmatpush1.bf16.xpose.msra.mxu0 0
    %156 = vmatprep.mubr.bf16.mxu0 0
    %157 = vmatmul.mubr.bf16.gmra.mrb[0].mxu0 %v122
    %v158 = vpop.f32.mrb[0].mxu0
    %v159 = vadd.f32 1e-12, %v158
    %v160 = vpop.f32.mrb[0].mxu0
    %v161 = vpop.f32.mrb[0].mxu0
    %v162 = vpop.f32.mrb[0].mxu0
    %163 = vdwg.mxu0
    %v165 = vsel %vm74, %v60, 0
    %167 = vmatprep.subr.bf16.mxu0 0
    %168 = vmatpush1.bf16.xpose.msra.mxu0 %v79
    %169 = vmatprep.subr.bf16.mxu0 0
    %170 = vmatpush1.bf16.xpose.msra.mxu0 0
    %171 = vmatprep.subr.bf16.mxu0 0
    %172 = vmatpush1.bf16.xpose.msra.mxu0 0
    %173 = vmatprep.subr.bf16.mxu0 0
    %174 = vmatpush1.bf16.xpose.msra.mxu0 0
    %175 = vmatprep.subr.bf16.mxu0 0
    %176 = vmatpush1.bf16.xpose.msra.mxu0 0
    %177 = vmatprep.subr.bf16.mxu0 0
    %178 = vmatpush1.bf16.xpose.msra.mxu0 0
    %179 = vmatprep.subr.bf16.mxu0 0
    %180 = vmatpush1.bf16.xpose.msra.mxu0 0
    %181 = vmatprep.subr.bf16.mxu0 0
    %182 = vmatpush1.bf16.xpose.msra.mxu0 0
    %183 = vmatprep.subr.bf16.mxu0 0
    %184 = vmatpush1.bf16.xpose.msra.mxu0 0
    %185 = vmatprep.subr.bf16.mxu0 0
    %186 = vmatpush1.bf16.xpose.msra.mxu0 0
    %187 = vmatprep.subr.bf16.mxu0 0
    %188 = vmatpush1.bf16.xpose.msra.mxu0 0
    %189 = vmatprep.subr.bf16.mxu0 0
    %190 = vmatpush1.bf16.xpose.msra.mxu0 0
    %191 = vmatprep.subr.bf16.mxu0 0
    %192 = vmatpush1.bf16.xpose.msra.mxu0 0
    %193 = vmatprep.subr.bf16.mxu0 0
    %194 = vmatpush1.bf16.xpose.msra.mxu0 0
    %195 = vmatprep.subr.bf16.mxu0 0
    %196 = vmatpush1.bf16.xpose.msra.mxu0 0
    %197 = vmatprep.subr.bf16.mxu0 0
    %198 = vmatpush1.bf16.xpose.msra.mxu0 0
    %199 = vmatprep.mubr.bf16.mxu0 0
    %200 = vmatmul.mubr.bf16.gmra.mrb[0].mxu0 %v165
    %v201 = vpop.f32.mrb[0].mxu0
    %v202 = vadd.f32 1e-12, %v201
    %v203 = vpop.f32.mrb[0].mxu0
    %v204 = vpop.f32.mrb[0].mxu0
    %v205 = vpop.f32.mrb[0].mxu0
    %206 = vdwg.mxu0
    %v208 = vsel %vm74, %v61, 0
    %210 = vmatprep.subr.bf16.mxu0 0
    %211 = vmatpush1.bf16.xpose.msra.mxu0 %v79
    %212 = vmatprep.subr.bf16.mxu0 0
    %213 = vmatpush1.bf16.xpose.msra.mxu0 0
    %214 = vmatprep.subr.bf16.mxu0 0
    %215 = vmatpush1.bf16.xpose.msra.mxu0 0
    %216 = vmatprep.subr.bf16.mxu0 0
    %217 = vmatpush1.bf16.xpose.msra.mxu0 0
    %218 = vmatprep.subr.bf16.mxu0 0
    %219 = vmatpush1.bf16.xpose.msra.mxu0 0
    %220 = vmatprep.subr.bf16.mxu0 0
    %221 = vmatpush1.bf16.xpose.msra.mxu0 0
    %222 = vmatprep.subr.bf16.mxu0 0
    %223 = vmatpush1.bf16.xpose.msra.mxu0 0
    %224 = vmatprep.subr.bf16.mxu0 0
    %225 = vmatpush1.bf16.xpose.msra.mxu0 0
    %226 = vmatprep.subr.bf16.mxu0 0
    %227 = vmatpush1.bf16.xpose.msra.mxu0 0
    %228 = vmatprep.subr.bf16.mxu0 0
    %229 = vmatpush1.bf16.xpose.msra.mxu0 0
    %230 = vmatprep.subr.bf16.mxu0 0
    %231 = vmatpush1.bf16.xpose.msra.mxu0 0
    %232 = vmatprep.subr.bf16.mxu0 0
    %233 = vmatpush1.bf16.xpose.msra.mxu0 0
    %234 = vmatprep.subr.bf16.mxu0 0
    %235 = vmatpush1.bf16.xpose.msra.mxu0 0
    %236 = vmatprep.subr.bf16.mxu0 0
    %237 = vmatpush1.bf16.xpose.msra.mxu0 0
    %238 = vmatprep.subr.bf16.mxu0 0
    %239 = vmatpush1.bf16.xpose.msra.mxu0 0
    %240 = vmatprep.subr.bf16.mxu0 0
    %241 = vmatpush1.bf16.xpose.msra.mxu0 0
    %242 = vmatprep.mubr.bf16.mxu0 0
    %243 = vmatmul.mubr.bf16.gmra.mrb[0].mxu0 %v208
    %v244 = vpop.f32.mrb[0].mxu0
    %v245 = vadd.f32 1e-12, %v244
    %v246 = vpop.f32.mrb[0].mxu0
    %v247 = vpop.f32.mrb[0].mxu0
    %v248 = vpop.f32.mrb[0].mxu0
    %249 = vdwg.mxu0
    %v251 = vsel %vm74, %v62, 0
    %253 = vmatprep.subr.bf16.mxu0 0
    %254 = vmatpush1.bf16.xpose.msra.mxu0 %v79
    %255 = vmatprep.subr.bf16.mxu0 0
    %256 = vmatpush1.bf16.xpose.msra.mxu0 0
    %257 = vmatprep.subr.bf16.mxu0 0
    %258 = vmatpush1.bf16.xpose.msra.mxu0 0
    %259 = vmatprep.subr.bf16.mxu0 0
    %260 = vmatpush1.bf16.xpose.msra.mxu0 0
    %261 = vmatprep.subr.bf16.mxu0 0
    %262 = vmatpush1.bf16.xpose.msra.mxu0 0
    %263 = vmatprep.subr.bf16.mxu0 0
    %264 = vmatpush1.bf16.xpose.msra.mxu0 0
    %265 = vmatprep.subr.bf16.mxu0 0
    %266 = vmatpush1.bf16.xpose.msra.mxu0 0
    %267 = vmatprep.subr.bf16.mxu0 0
    %268 = vmatpush1.bf16.xpose.msra.mxu0 0
    %269 = vmatprep.subr.bf16.mxu0 0
    %270 = vmatpush1.bf16.xpose.msra.mxu0 0
    %271 = vmatprep.subr.bf16.mxu0 0
    %272 = vmatpush1.bf16.xpose.msra.mxu0 0
    %273 = vmatprep.subr.bf16.mxu0 0
    %274 = vmatpush1.bf16.xpose.msra.mxu0 0
    %275 = vmatprep.subr.bf16.mxu0 0
    %276 = vmatpush1.bf16.xpose.msra.mxu0 0
    %277 = vmatprep.subr.bf16.mxu0 0
    %278 = vmatpush1.bf16.xpose.msra.mxu0 0
    %279 = vmatprep.subr.bf16.mxu0 0
    %280 = vmatpush1.bf16.xpose.msra.mxu0 0
    %281 = vmatprep.subr.bf16.mxu0 0
    %282 = vmatpush1.bf16.xpose.msra.mxu0 0
    %283 = vmatprep.subr.bf16.mxu0 0
    %284 = vmatpush1.bf16.xpose.msra.mxu0 0
    %285 = vmatprep.mubr.bf16.mxu0 0
    %286 = vmatmul.mubr.bf16.gmra.mrb[0].mxu0 %v251
    %v287 = vpop.f32.mrb[0].mxu0
    %v288 = vadd.f32 1e-12, %v287
    %v289 = vpop.f32.mrb[0].mxu0
    %v290 = vpop.f32.mrb[0].mxu0
    %v291 = vpop.f32.mrb[0].mxu0
    %292 = vdwg.mxu0
    %v294 = vsel %vm74, %v63, 0
    %296 = vmatprep.subr.bf16.mxu0 0
    %297 = vmatpush1.bf16.xpose.msra.mxu0 %v79
    %298 = vmatprep.subr.bf16.mxu0 0
    %299 = vmatpush1.bf16.xpose.msra.mxu0 0
    %300 = vmatprep.subr.bf16.mxu0 0
    %301 = vmatpush1.bf16.xpose.msra.mxu0 0
    %302 = vmatprep.subr.bf16.mxu0 0
    %303 = vmatpush1.bf16.xpose.msra.mxu0 0
    %304 = vmatprep.subr.bf16.mxu0 0
    %305 = vmatpush1.bf16.xpose.msra.mxu0 0
    %306 = vmatprep.subr.bf16.mxu0 0
    %307 = vmatpush1.bf16.xpose.msra.mxu0 0
    %308 = vmatprep.subr.bf16.mxu0 0
    %309 = vmatpush1.bf16.xpose.msra.mxu0 0
    %310 = vmatprep.subr.bf16.mxu0 0
    %311 = vmatpush1.bf16.xpose.msra.mxu0 0
    %312 = vmatprep.subr.bf16.mxu0 0
    %313 = vmatpush1.bf16.xpose.msra.mxu0 0
    %314 = vmatprep.subr.bf16.mxu0 0
    %315 = vmatpush1.bf16.xpose.msra.mxu0 0
    %316 = vmatprep.subr.bf16.mxu0 0
    %317 = vmatpush1.bf16.xpose.msra.mxu0 0
    %318 = vmatprep.subr.bf16.mxu0 0
    %319 = vmatpush1.bf16.xpose.msra.mxu0 0
    %320 = vmatprep.subr.bf16.mxu0 0
    %321 = vmatpush1.bf16.xpose.msra.mxu0 0
    %322 = vmatprep.subr.bf16.mxu0 0
    %323 = vmatpush1.bf16.xpose.msra.mxu0 0
    %324 = vmatprep.subr.bf16.mxu0 0
    %325 = vmatpush1.bf16.xpose.msra.mxu0 0
    %326 = vmatprep.subr.bf16.mxu0 0
    %327 = vmatpush1.bf16.xpose.msra.mxu0 0
    %328 = vmatprep.mubr.bf16.mxu0 0
    %329 = vmatmul.mubr.bf16.gmra.mrb[0].mxu0 %v294
    %v330 = vpop.f32.mrb[0].mxu0
    %v331 = vadd.f32 1e-12, %v330
    %v332 = vpop.f32.mrb[0].mxu0
    %v333 = vpop.f32.mrb[0].mxu0
    %v334 = vpop.f32.mrb[0].mxu0
    %335 = vdwg.mxu0
    %v337 = vsel %vm74, %v64, 0
    %339 = vmatprep.subr.bf16.mxu0 0
    %340 = vmatpush1.bf16.xpose.msra.mxu0 %v79
    %341 = vmatprep.subr.bf16.mxu0 0
    %342 = vmatpush1.bf16.xpose.msra.mxu0 0
    %343 = vmatprep.subr.bf16.mxu0 0
    %344 = vmatpush1.bf16.xpose.msra.mxu0 0
    %345 = vmatprep.subr.bf16.mxu0 0
    %346 = vmatpush1.bf16.xpose.msra.mxu0 0
    %347 = vmatprep.subr.bf16.mxu0 0
    %348 = vmatpush1.bf16.xpose.msra.mxu0 0
    %349 = vmatprep.subr.bf16.mxu0 0
    %350 = vmatpush1.bf16.xpose.msra.mxu0 0
    %351 = vmatprep.subr.bf16.mxu0 0
    %352 = vmatpush1.bf16.xpose.msra.mxu0 0
    %353 = vmatprep.subr.bf16.mxu0 0
    %354 = vmatpush1.bf16.xpose.msra.mxu0 0
    %355 = vmatprep.subr.bf16.mxu0 0
    %356 = vmatpush1.bf16.xpose.msra.mxu0 0
    %357 = vmatprep.subr.bf16.mxu0 0
    %358 = vmatpush1.bf16.xpose.msra.mxu0 0
    %359 = vmatprep.subr.bf16.mxu0 0
    %360 = vmatpush1.bf16.xpose.msra.mxu0 0
    %361 = vmatprep.subr.bf16.mxu0 0
    %362 = vmatpush1.bf16.xpose.msra.mxu0 0
    %363 = vmatprep.subr.bf16.mxu0 0
    %364 = vmatpush1.bf16.xpose.msra.mxu0 0
    %365 = vmatprep.subr.bf16.mxu0 0
    %366 = vmatpush1.bf16.xpose.msra.mxu0 0
    %367 = vmatprep.subr.bf16.mxu0 0
    %368 = vmatpush1.bf16.xpose.msra.mxu0 0
    %369 = vmatprep.subr.bf16.mxu0 0
    %370 = vmatpush1.bf16.xpose.msra.mxu0 0
    %371 = vmatprep.mubr.bf16.mxu0 0
    %372 = vmatmul.mubr.bf16.gmra.mrb[0].mxu0 %v337
    %v373 = vpop.f32.mrb[0].mxu0
    %v374 = vadd.f32 1e-12, %v373
    %v375 = vpop.f32.mrb[0].mxu0
    %v376 = vpop.f32.mrb[0].mxu0
    %v377 = vpop.f32.mrb[0].mxu0
    %378 = vdwg.mxu0
    %v380 = vsel %vm74, %v65, 0
    %382 = vmatprep.subr.bf16.mxu0 0
    %383 = vmatpush1.bf16.xpose.msra.mxu0 %v79
    %384 = vmatprep.subr.bf16.mxu0 0
    %385 = vmatpush1.bf16.xpose.msra.mxu0 0
    %386 = vmatprep.subr.bf16.mxu0 0
    %387 = vmatpush1.bf16.xpose.msra.mxu0 0
    %388 = vmatprep.subr.bf16.mxu0 0
    %389 = vmatpush1.bf16.xpose.msra.mxu0 0
    %390 = vmatprep.subr.bf16.mxu0 0
    %391 = vmatpush1.bf16.xpose.msra.mxu0 0
    %392 = vmatprep.subr.bf16.mxu0 0
    %393 = vmatpush1.bf16.xpose.msra.mxu0 0
    %394 = vmatprep.subr.bf16.mxu0 0
    %395 = vmatpush1.bf16.xpose.msra.mxu0 0
    %396 = vmatprep.subr.bf16.mxu0 0
    %397 = vmatpush1.bf16.xpose.msra.mxu0 0
    %398 = vmatprep.subr.bf16.mxu0 0
    %399 = vmatpush1.bf16.xpose.msra.mxu0 0
    %400 = vmatprep.subr.bf16.mxu0 0
    %401 = vmatpush1.bf16.xpose.msra.mxu0 0
    %402 = vmatprep.subr.bf16.mxu0 0
    %403 = vmatpush1.bf16.xpose.msra.mxu0 0
    %404 = vmatprep.subr.bf16.mxu0 0
    %405 = vmatpush1.bf16.xpose.msra.mxu0 0
    %406 = vmatprep.subr.bf16.mxu0 0
    %407 = vmatpush1.bf16.xpose.msra.mxu0 0
    %408 = vmatprep.subr.bf16.mxu0 0
    %409 = vmatpush1.bf16.xpose.msra.mxu0 0
    %410 = vmatprep.subr.bf16.mxu0 0
    %411 = vmatpush1.bf16.xpose.msra.mxu0 0
    %412 = vmatprep.subr.bf16.mxu0 0
    %413 = vmatpush1.bf16.xpose.msra.mxu0 0
    %414 = vmatprep.mubr.bf16.mxu0 0
    %415 = vmatmul.mubr.bf16.gmra.mrb[0].mxu0 %v380
    %v416 = vpop.f32.mrb[0].mxu0
    %v417 = vadd.f32 1e-12, %v416
    %v418 = vpop.f32.mrb[0].mxu0
    %v419 = vpop.f32.mrb[0].mxu0
    %v420 = vpop.f32.mrb[0].mxu0
    %421 = vdwg.mxu0
    %v422 = vrsqrt.pop %v116
    %v423 = vrsqrt.pop %v159
    %v424 = vrsqrt.pop %v202
    %v425 = vrsqrt.pop %v245
    %v426 = vrsqrt.pop %v288
    %v427 = vrsqrt.pop %v331
    %v428 = vrsqrt.pop %v374
    %v429 = vrsqrt.pop %v417
    %vm430 = vcmask 7168
    %431 = vst.msk [vmem:[#allocation2] sm:$0xff] %vm430, %v422
    %432 = vst.msk [vmem:[#allocation2 + $0x8] sm:$0xff] %vm430, %v423
    %433 = vst.msk [vmem:[#allocation2 + $0x10] sm:$0xff] %vm430, %v424
    %434 = vst.msk [vmem:[#allocation2 + $0x18] sm:$0xff] %vm430, %v425
    %435 = vst.msk [vmem:[#allocation2 + $0x20] sm:$0xff] %vm430, %v426
    %436 = vst.msk [vmem:[#allocation2 + $0x28] sm:$0xff] %vm430, %v427
    %437 = vst.msk [vmem:[#allocation2 + $0x30] sm:$0xff] %vm430, %v428
    %438 = vst.msk [vmem:[#allocation2 + $0x38] sm:$0xff] %vm430, %v429
    %v440 = vsel %vm74, %v66, 0
    %442 = vmatprep.subr.bf16.mxu0 0
    %443 = vmatpush1.bf16.xpose.msra.mxu0 %v440
    %444 = vmatprep.subr.bf16.mxu0 0
    %445 = vmatpush1.bf16.xpose.msra.mxu0 0
    %446 = vmatprep.subr.bf16.mxu0 0
    %447 = vmatpush1.bf16.xpose.msra.mxu0 0
    %448 = vmatprep.subr.bf16.mxu0 0
    %449 = vmatpush1.bf16.xpose.msra.mxu0 0
    %450 = vmatprep.subr.bf16.mxu0 0
    %451 = vmatpush1.bf16.xpose.msra.mxu0 0
    %452 = vmatprep.subr.bf16.mxu0 0
    %453 = vmatpush1.bf16.xpose.msra.mxu0 0
    %454 = vmatprep.subr.bf16.mxu0 0
    %455 = vmatpush1.bf16.xpose.msra.mxu0 0
    %456 = vmatprep.subr.bf16.mxu0 0
    %457 = vmatpush1.bf16.xpose.msra.mxu0 0
    %458 = vmatprep.subr.bf16.mxu0 0
    %459 = vmatpush1.bf16.xpose.msra.mxu0 0
    %460 = vmatprep.subr.bf16.mxu0 0
    %461 = vmatpush1.bf16.xpose.msra.mxu0 0
    %462 = vmatprep.subr.bf16.mxu0 0
    %463 = vmatpush1.bf16.xpose.msra.mxu0 0
    %464 = vmatprep.subr.bf16.mxu0 0
    %465 = vmatpush1.bf16.xpose.msra.mxu0 0
    %466 = vmatprep.subr.bf16.mxu0 0
    %467 = vmatpush1.bf16.xpose.msra.mxu0 0
    %468 = vmatprep.subr.bf16.mxu0 0
    %469 = vmatpush1.bf16.xpose.msra.mxu0 0
    %470 = vmatprep.subr.bf16.mxu0 0
    %471 = vmatpush1.bf16.xpose.msra.mxu0 0
    %472 = vmatprep.subr.bf16.mxu0 0
    %473 = vmatpush1.bf16.xpose.msra.mxu0 0
    %474 = vmatprep.mubr.bf16.mxu0 0
    %475 = vmatmul.mubr.bf16.gmra.mrb[0].mxu0 %v79
    %v476 = vpop.f32.mrb[0].mxu0
    %v477 = vadd.f32 1e-12, %v476
    %v478 = vpop.f32.mrb[0].mxu0
    %v479 = vpop.f32.mrb[0].mxu0
    %v480 = vpop.f32.mrb[0].mxu0
    %481 = vdwg.mxu0
    %v483 = vsel %vm74, %v67, 0
    %485 = vmatprep.subr.bf16.mxu0 0
    %486 = vmatpush1.bf16.xpose.msra.mxu0 %v483
    %487 = vmatprep.subr.bf16.mxu0 0
    %488 = vmatpush1.bf16.xpose.msra.mxu0 0
    %489 = vmatprep.subr.bf16.mxu0 0
    %490 = vmatpush1.bf16.xpose.msra.mxu0 0
    %491 = vmatprep.subr.bf16.mxu0 0
    %492 = vmatpush1.bf16.xpose.msra.mxu0 0
    %493 = vmatprep.subr.bf16.mxu0 0
    %494 = vmatpush1.bf16.xpose.msra.mxu0 0
    %495 = vmatprep.subr.bf16.mxu0 0
    %496 = vmatpush1.bf16.xpose.msra.mxu0 0
    %497 = vmatprep.subr.bf16.mxu0 0
    %498 = vmatpush1.bf16.xpose.msra.mxu0 0
    %499 = vmatprep.subr.bf16.mxu0 0
    %500 = vmatpush1.bf16.xpose.msra.mxu0 0
    %501 = vmatprep.subr.bf16.mxu0 0
    %502 = vmatpush1.bf16.xpose.msra.mxu0 0
    %503 = vmatprep.subr.bf16.mxu0 0
    %504 = vmatpush1.bf16.xpose.msra.mxu0 0
    %505 = vmatprep.subr.bf16.mxu0 0
    %506 = vmatpush1.bf16.xpose.msra.mxu0 0
    %507 = vmatprep.subr.bf16.mxu0 0
    %508 = vmatpush1.bf16.xpose.msra.mxu0 0
    %509 = vmatprep.subr.bf16.mxu0 0
    %510 = vmatpush1.bf16.xpose.msra.mxu0 0
    %511 = vmatprep.subr.bf16.mxu0 0
    %512 = vmatpush1.bf16.xpose.msra.mxu0 0
    %513 = vmatprep.subr.bf16.mxu0 0
    %514 = vmatpush1.bf16.xpose.msra.mxu0 0
    %515 = vmatprep.subr.bf16.mxu0 0
    %516 = vmatpush1.bf16.xpose.msra.mxu0 0
    %517 = vmatprep.mubr.bf16.mxu0 0
    %518 = vmatmul.mubr.bf16.gmra.mrb[0].mxu0 %v79
    %v519 = vpop.f32.mrb[0].mxu0
    %v520 = vadd.f32 1e-12, %v519
    %v521 = vpop.f32.mrb[0].mxu0
    %v522 = vpop.f32.mrb[0].mxu0
    %v523 = vpop.f32.mrb[0].mxu0
    %524 = vdwg.mxu0
    %v526 = vsel %vm74, %v68, 0
    %528 = vmatprep.subr.bf16.mxu0 0
    %529 = vmatpush1.bf16.xpose.msra.mxu0 %v526
    %530 = vmatprep.subr.bf16.mxu0 0
    %531 = vmatpush1.bf16.xpose.msra.mxu0 0
    %532 = vmatprep.subr.bf16.mxu0 0
    %533 = vmatpush1.bf16.xpose.msra.mxu0 0
    %534 = vmatprep.subr.bf16.mxu0 0
    %535 = vmatpush1.bf16.xpose.msra.mxu0 0
    %536 = vmatprep.subr.bf16.mxu0 0
    %537 = vmatpush1.bf16.xpose.msra.mxu0 0
    %538 = vmatprep.subr.bf16.mxu0 0
    %539 = vmatpush1.bf16.xpose.msra.mxu0 0
    %540 = vmatprep.subr.bf16.mxu0 0
    %541 = vmatpush1.bf16.xpose.msra.mxu0 0
    %542 = vmatprep.subr.bf16.mxu0 0
    %543 = vmatpush1.bf16.xpose.msra.mxu0 0
    %544 = vmatprep.subr.bf16.mxu0 0
    %545 = vmatpush1.bf16.xpose.msra.mxu0 0
    %546 = vmatprep.subr.bf16.mxu0 0
    %547 = vmatpush1.bf16.xpose.msra.mxu0 0
    %548 = vmatprep.subr.bf16.mxu0 0
    %549 = vmatpush1.bf16.xpose.msra.mxu0 0
    %550 = vmatprep.subr.bf16.mxu0 0
    %551 = vmatpush1.bf16.xpose.msra.mxu0 0
    %552 = vmatprep.subr.bf16.mxu0 0
    %553 = vmatpush1.bf16.xpose.msra.mxu0 0
    %554 = vmatprep.subr.bf16.mxu0 0
    %555 = vmatpush1.bf16.xpose.msra.mxu0 0
    %556 = vmatprep.subr.bf16.mxu0 0
    %557 = vmatpush1.bf16.xpose.msra.mxu0 0
    %558 = vmatprep.subr.bf16.mxu0 0
    %559 = vmatpush1.bf16.xpose.msra.mxu0 0
    %560 = vmatprep.mubr.bf16.mxu0 0
    %561 = vmatmul.mubr.bf16.gmra.mrb[0].mxu0 %v79
    %v562 = vpop.f32.mrb[0].mxu0
    %v563 = vadd.f32 1e-12, %v562
    %v564 = vpop.f32.mrb[0].mxu0
    %v565 = vpop.f32.mrb[0].mxu0
    %v566 = vpop.f32.mrb[0].mxu0
    %567 = vdwg.mxu0
    %v569 = vsel %vm74, %v69, 0
    %571 = vmatprep.subr.bf16.mxu0 0
    %572 = vmatpush1.bf16.xpose.msra.mxu0 %v569
    %573 = vmatprep.subr.bf16.mxu0 0
    %574 = vmatpush1.bf16.xpose.msra.mxu0 0
    %575 = vmatprep.subr.bf16.mxu0 0
    %576 = vmatpush1.bf16.xpose.msra.mxu0 0
    %577 = vmatprep.subr.bf16.mxu0 0
    %578 = vmatpush1.bf16.xpose.msra.mxu0 0
    %579 = vmatprep.subr.bf16.mxu0 0
    %580 = vmatpush1.bf16.xpose.msra.mxu0 0
    %581 = vmatprep.subr.bf16.mxu0 0
    %582 = vmatpush1.bf16.xpose.msra.mxu0 0
    %583 = vmatprep.subr.bf16.mxu0 0
    %584 = vmatpush1.bf16.xpose.msra.mxu0 0
    %585 = vmatprep.subr.bf16.mxu0 0
    %586 = vmatpush1.bf16.xpose.msra.mxu0 0
    %587 = vmatprep.subr.bf16.mxu0 0
    %588 = vmatpush1.bf16.xpose.msra.mxu0 0
    %589 = vmatprep.subr.bf16.mxu0 0
    %590 = vmatpush1.bf16.xpose.msra.mxu0 0
    %591 = vmatprep.subr.bf16.mxu0 0
    %592 = vmatpush1.bf16.xpose.msra.mxu0 0
    %593 = vmatprep.subr.bf16.mxu0 0
    %594 = vmatpush1.bf16.xpose.msra.mxu0 0
    %595 = vmatprep.subr.bf16.mxu0 0
    %596 = vmatpush1.bf16.xpose.msra.mxu0 0
    %597 = vmatprep.subr.bf16.mxu0 0
    %598 = vmatpush1.bf16.xpose.msra.mxu0 0
    %599 = vmatprep.subr.bf16.mxu0 0
    %600 = vmatpush1.bf16.xpose.msra.mxu0 0
    %601 = vmatprep.subr.bf16.mxu0 0
    %602 = vmatpush1.bf16.xpose.msra.mxu0 0
    %603 = vmatprep.mubr.bf16.mxu0 0
    %604 = vmatmul.mubr.bf16.gmra.mrb[0].mxu0 %v79
    %v605 = vpop.f32.mrb[0].mxu0
    %v606 = vadd.f32 1e-12, %v605
    %v607 = vpop.f32.mrb[0].mxu0
    %v608 = vpop.f32.mrb[0].mxu0
    %v609 = vpop.f32.mrb[0].mxu0
    %610 = vdwg.mxu0
    %v612 = vsel %vm74, %v70, 0
    %614 = vmatprep.subr.bf16.mxu0 0
    %615 = vmatpush1.bf16.xpose.msra.mxu0 %v612
    %616 = vmatprep.subr.bf16.mxu0 0
    %617 = vmatpush1.bf16.xpose.msra.mxu0 0
    %618 = vmatprep.subr.bf16.mxu0 0
    %619 = vmatpush1.bf16.xpose.msra.mxu0 0
    %620 = vmatprep.subr.bf16.mxu0 0
    %621 = vmatpush1.bf16.xpose.msra.mxu0 0
    %622 = vmatprep.subr.bf16.mxu0 0
    %623 = vmatpush1.bf16.xpose.msra.mxu0 0
    %624 = vmatprep.subr.bf16.mxu0 0
    %625 = vmatpush1.bf16.xpose.msra.mxu0 0
    %626 = vmatprep.subr.bf16.mxu0 0
    %627 = vmatpush1.bf16.xpose.msra.mxu0 0
    %628 = vmatprep.subr.bf16.mxu0 0
    %629 = vmatpush1.bf16.xpose.msra.mxu0 0
    %630 = vmatprep.subr.bf16.mxu0 0
    %631 = vmatpush1.bf16.xpose.msra.mxu0 0
    %632 = vmatprep.subr.bf16.mxu0 0
    %633 = vmatpush1.bf16.xpose.msra.mxu0 0
    %634 = vmatprep.subr.bf16.mxu0 0
    %635 = vmatpush1.bf16.xpose.msra.mxu0 0
    %636 = vmatprep.subr.bf16.mxu0 0
    %637 = vmatpush1.bf16.xpose.msra.mxu0 0
    %638 = vmatprep.subr.bf16.mxu0 0
    %639 = vmatpush1.bf16.xpose.msra.mxu0 0
    %640 = vmatprep.subr.bf16.mxu0 0
    %641 = vmatpush1.bf16.xpose.msra.mxu0 0
    %642 = vmatprep.subr.bf16.mxu0 0
    %643 = vmatpush1.bf16.xpose.msra.mxu0 0
    %644 = vmatprep.subr.bf16.mxu0 0
    %645 = vmatpush1.bf16.xpose.msra.mxu0 0
    %646 = vmatprep.mubr.bf16.mxu0 0
    %647 = vmatmul.mubr.bf16.gmra.mrb[0].mxu0 %v79
    %v648 = vpop.f32.mrb[0].mxu0
    %v649 = vadd.f32 1e-12, %v648
    %v650 = vpop.f32.mrb[0].mxu0
    %v651 = vpop.f32.mrb[0].mxu0
    %v652 = vpop.f32.mrb[0].mxu0
    %653 = vdwg.mxu0
    %v655 = vsel %vm74, %v71, 0
    %657 = vmatprep.subr.bf16.mxu0 0
    %658 = vmatpush1.bf16.xpose.msra.mxu0 %v655
    %659 = vmatprep.subr.bf16.mxu0 0
    %660 = vmatpush1.bf16.xpose.msra.mxu0 0
    %661 = vmatprep.subr.bf16.mxu0 0
    %662 = vmatpush1.bf16.xpose.msra.mxu0 0
    %663 = vmatprep.subr.bf16.mxu0 0
    %664 = vmatpush1.bf16.xpose.msra.mxu0 0
    %665 = vmatprep.subr.bf16.mxu0 0
    %666 = vmatpush1.bf16.xpose.msra.mxu0 0
    %667 = vmatprep.subr.bf16.mxu0 0
    %668 = vmatpush1.bf16.xpose.msra.mxu0 0
    %669 = vmatprep.subr.bf16.mxu0 0
    %670 = vmatpush1.bf16.xpose.msra.mxu0 0
    %671 = vmatprep.subr.bf16.mxu0 0
    %672 = vmatpush1.bf16.xpose.msra.mxu0 0
    %673 = vmatprep.subr.bf16.mxu0 0
    %674 = vmatpush1.bf16.xpose.msra.mxu0 0
    %675 = vmatprep.subr.bf16.mxu0 0
    %676 = vmatpush1.bf16.xpose.msra.mxu0 0
    %677 = vmatprep.subr.bf16.mxu0 0
    %678 = vmatpush1.bf16.xpose.msra.mxu0 0
    %679 = vmatprep.subr.bf16.mxu0 0
    %680 = vmatpush1.bf16.xpose.msra.mxu0 0
    %681 = vmatprep.subr.bf16.mxu0 0
    %682 = vmatpush1.bf16.xpose.msra.mxu0 0
    %683 = vmatprep.subr.bf16.mxu0 0
    %684 = vmatpush1.bf16.xpose.msra.mxu0 0
    %685 = vmatprep.subr.bf16.mxu0 0
    %686 = vmatpush1.bf16.xpose.msra.mxu0 0
    %687 = vmatprep.subr.bf16.mxu0 0
    %688 = vmatpush1.bf16.xpose.msra.mxu0 0
    %689 = vmatprep.mubr.bf16.mxu0 0
    %690 = vmatmul.mubr.bf16.gmra.mrb[0].mxu0 %v79
    %v691 = vpop.f32.mrb[0].mxu0
    %v692 = vadd.f32 1e-12, %v691
    %v693 = vpop.f32.mrb[0].mxu0
    %v694 = vpop.f32.mrb[0].mxu0
    %v695 = vpop.f32.mrb[0].mxu0
    %696 = vdwg.mxu0
    %v698 = vsel %vm74, %v72, 0
    %700 = vmatprep.subr.bf16.mxu0 0
    %701 = vmatpush1.bf16.xpose.msra.mxu0 %v698
    %702 = vmatprep.subr.bf16.mxu0 0
    %703 = vmatpush1.bf16.xpose.msra.mxu0 0
    %704 = vmatprep.subr.bf16.mxu0 0
    %705 = vmatpush1.bf16.xpose.msra.mxu0 0
    %706 = vmatprep.subr.bf16.mxu0 0
    %707 = vmatpush1.bf16.xpose.msra.mxu0 0
    %708 = vmatprep.subr.bf16.mxu0 0
    %709 = vmatpush1.bf16.xpose.msra.mxu0 0
    %710 = vmatprep.subr.bf16.mxu0 0
    %711 = vmatpush1.bf16.xpose.msra.mxu0 0
    %712 = vmatprep.subr.bf16.mxu0 0
    %713 = vmatpush1.bf16.xpose.msra.mxu0 0
    %714 = vmatprep.subr.bf16.mxu0 0
    %715 = vmatpush1.bf16.xpose.msra.mxu0 0
    %716 = vmatprep.subr.bf16.mxu0 0
    %717 = vmatpush1.bf16.xpose.msra.mxu0 0
    %718 = vmatprep.subr.bf16.mxu0 0
    %719 = vmatpush1.bf16.xpose.msra.mxu0 0
    %720 = vmatprep.subr.bf16.mxu0 0
    %721 = vmatpush1.bf16.xpose.msra.mxu0 0
    %722 = vmatprep.subr.bf16.mxu0 0
    %723 = vmatpush1.bf16.xpose.msra.mxu0 0
    %724 = vmatprep.subr.bf16.mxu0 0
    %725 = vmatpush1.bf16.xpose.msra.mxu0 0
    %726 = vmatprep.subr.bf16.mxu0 0
    %727 = vmatpush1.bf16.xpose.msra.mxu0 0
    %728 = vmatprep.subr.bf16.mxu0 0
    %729 = vmatpush1.bf16.xpose.msra.mxu0 0
    %730 = vmatprep.subr.bf16.mxu0 0
    %731 = vmatpush1.bf16.xpose.msra.mxu0 0
    %732 = vmatprep.mubr.bf16.mxu0 0
    %733 = vmatmul.mubr.bf16.gmra.mrb[0].mxu0 %v79
    %v734 = vpop.f32.mrb[0].mxu0
    %v735 = vadd.f32 1e-12, %v734
    %v736 = vpop.f32.mrb[0].mxu0
    %v737 = vpop.f32.mrb[0].mxu0
    %v738 = vpop.f32.mrb[0].mxu0
    %739 = vdwg.mxu0
    %v741 = vsel %vm74, %v73, 0
    %743 = vmatprep.subr.bf16.mxu0 0
    %744 = vmatpush1.bf16.xpose.msra.mxu0 %v741
    %745 = vmatprep.subr.bf16.mxu0 0
    %746 = vmatpush1.bf16.xpose.msra.mxu0 0
    %747 = vmatprep.subr.bf16.mxu0 0
    %748 = vmatpush1.bf16.xpose.msra.mxu0 0
    %749 = vmatprep.subr.bf16.mxu0 0
    %750 = vmatpush1.bf16.xpose.msra.mxu0 0
    %751 = vmatprep.subr.bf16.mxu0 0
    %752 = vmatpush1.bf16.xpose.msra.mxu0 0
    %753 = vmatprep.subr.bf16.mxu0 0
    %754 = vmatpush1.bf16.xpose.msra.mxu0 0
    %755 = vmatprep.subr.bf16.mxu0 0
    %756 = vmatpush1.bf16.xpose.msra.mxu0 0
    %757 = vmatprep.subr.bf16.mxu0 0
    %758 = vmatpush1.bf16.xpose.msra.mxu0 0
    %759 = vmatprep.subr.bf16.mxu0 0
    %760 = vmatpush1.bf16.xpose.msra.mxu0 0
    %761 = vmatprep.subr.bf16.mxu0 0
    %762 = vmatpush1.bf16.xpose.msra.mxu0 0
    %763 = vmatprep.subr.bf16.mxu0 0
    %764 = vmatpush1.bf16.xpose.msra.mxu0 0
    %765 = vmatprep.subr.bf16.mxu0 0
    %766 = vmatpush1.bf16.xpose.msra.mxu0 0
    %767 = vmatprep.subr.bf16.mxu0 0
    %768 = vmatpush1.bf16.xpose.msra.mxu0 0
    %769 = vmatprep.subr.bf16.mxu0 0
    %770 = vmatpush1.bf16.xpose.msra.mxu0 0
    %771 = vmatprep.subr.bf16.mxu0 0
    %772 = vmatpush1.bf16.xpose.msra.mxu0 0
    %773 = vmatprep.subr.bf16.mxu0 0
    %774 = vmatpush1.bf16.xpose.msra.mxu0 0
    %775 = vmatprep.mubr.bf16.mxu0 0
    %776 = vmatmul.mubr.bf16.gmra.mrb[0].mxu0 %v79
    %v777 = vpop.f32.mrb[0].mxu0
    %v778 = vadd.f32 1e-12, %v777
    %v779 = vpop.f32.mrb[0].mxu0
    %v780 = vpop.f32.mrb[0].mxu0
    %v781 = vpop.f32.mrb[0].mxu0
    %782 = vdwg.mxu0
    %v783 = vrsqrt.pop %v477
    %v784 = vrsqrt.pop %v520
    %v785 = vrsqrt.pop %v563
    %v786 = vrsqrt.pop %v606
    %v787 = vrsqrt.pop %v649
    %v788 = vrsqrt.pop %v692
    %v789 = vrsqrt.pop %v735
    %v790 = vrsqrt.pop %v778
    %vm791 = vcmask 57344
    %792 = vst.msk [vmem:[#allocation3] sm:$0x1] %vm791, %v783
    %793 = vst.msk [vmem:[#allocation3 + $0x1] sm:$0x1] %vm791, %v784
    %794 = vst.msk [vmem:[#allocation3 + $0x2] sm:$0x1] %vm791, %v785
    %795 = vst.msk [vmem:[#allocation3 + $0x3] sm:$0x1] %vm791, %v786
    %796 = vst.msk [vmem:[#allocation3 + $0x4] sm:$0x1] %vm791, %v787
    %797 = vst.msk [vmem:[#allocation3 + $0x5] sm:$0x1] %vm791, %v788
    %798 = vst.msk [vmem:[#allocation3 + $0x6] sm:$0x1] %vm791, %v789
    %799 = vst.msk [vmem:[#allocation3 + $0x7] sm:$0x1] %vm791, %v790
    %v800 = vlaneseq
    %v801 = vshrl.u32 %v800, 7
    loop: start=0, step=1, limit=8
    $region18: #{tpu_custom_call.1} parent=1 // loop_pre_header
      _
    $region19: #{tpu_custom_call.1} parent=1 // loop_header
      %s803 = sphi 0, %s807
      %p804 = scmp.ge.s32.totalorder %s803, 8
      %v808 = vphi 0.0, %v911
    $region20: #{tpu_custom_call.1} parent=1 // loop_header_branch
      %806 = sbr.rel (%p804) target = $region24
    $region21: #{tpu_custom_call.1} parent=1 // loop_body
      %s809 = smul.addr %s803, 4
      %s810 = scalar_lea.vmem [#allocation4], %s809
      %v811 = vld [vmem:[%s810] sm:$0xf]
      %s812 = smul.addr %s803, 4
      %s813 = scalar_lea.vmem [#allocation7], %s812
      %v814 = vld [vmem:[%s813] sm:$0xf]
      %v816 = vsel %vm74, %v811, 0
      %v819 = vsel %vm74, %v814, 0
      %821 = vmatprep.subr.bf16.mxu0 0
      %822 = vmatpush1.bf16.xpose.msra.mxu0 %v819
      %823 = vmatprep.subr.bf16.mxu0 0
      %824 = vmatpush1.bf16.xpose.msra.mxu0 0
      %825 = vmatprep.subr.bf16.mxu0 0
      %826 = vmatpush1.bf16.xpose.msra.mxu0 0
      %827 = vmatprep.subr.bf16.mxu0 0
      %828 = vmatpush1.bf16.xpose.msra.mxu0 0
      %829 = vmatprep.subr.bf16.mxu0 0
      %830 = vmatpush1.bf16.xpose.msra.mxu0 0
      %831 = vmatprep.subr.bf16.mxu0 0
      %832 = vmatpush1.bf16.xpose.msra.mxu0 0
      %833 = vmatprep.subr.bf16.mxu0 0
      %834 = vmatpush1.bf16.xpose.msra.mxu0 0
      %835 = vmatprep.subr.bf16.mxu0 0
      %836 = vmatpush1.bf16.xpose.msra.mxu0 0
      %837 = vmatprep.subr.bf16.mxu0 0
      %838 = vmatpush1.bf16.xpose.msra.mxu0 0
      %839 = vmatprep.subr.bf16.mxu0 0
      %840 = vmatpush1.bf16.xpose.msra.mxu0 0
      %841 = vmatprep.subr.bf16.mxu0 0
      %842 = vmatpush1.bf16.xpose.msra.mxu0 0
      %843 = vmatprep.subr.bf16.mxu0 0
      %844 = vmatpush1.bf16.xpose.msra.mxu0 0
      %845 = vmatprep.subr.bf16.mxu0 0
      %846 = vmatpush1.bf16.xpose.msra.mxu0 0
      %847 = vmatprep.subr.bf16.mxu0 0
      %848 = vmatpush1.bf16.xpose.msra.mxu0 0
      %849 = vmatprep.subr.bf16.mxu0 0
      %850 = vmatpush1.bf16.xpose.msra.mxu0 0
      %851 = vmatprep.subr.bf16.mxu0 0
      %852 = vmatpush1.bf16.xpose.msra.mxu0 0
      %853 = vmatprep.mubr.bf16.mxu0 0
      %854 = vmatmul.mubr.bf16.gmra.mrb[0].mxu0 %v816
      %v855 = vpop.f32.mrb[0].mxu0
      %v856 = vadd.f32 0.0, %v855
      %v857 = vpop.f32.mrb[0].mxu0
      %v858 = vpop.f32.mrb[0].mxu0
      %v859 = vpop.f32.mrb[0].mxu0
      %860 = vdwg.mxu0
      %s861 = smul.u32 %s803, 8
      %s862 = scalar_lea.vmem [#allocation2], %s861
      %v863 = vld [vmem:[%s862] sm:$0xff]
      %865 = vset.pattern.permute.xlu0 0
      %866 = vperm.xlu0 %865, %v863
      %v867 = vpop.permute.xlu0 %866
      %v869 = vmul.f32 %v856, %v867
      %s870 = scalar_lea.vmem [#allocation3], %s803
      %v871 = vld [vmem:[%s870] sm:$0x1]
      %v873 = vlaneseq
      %v874 = vshrl.u32 %v873, 7
      %v875 = vsub.s32 0, %v874
      %v876 = vrot.slane %v871, %v875
      %v878 = vmul.f32 %v869, %v876
      %vm879 = vcmask 64512
      %v880 = vsel %vm879, %v878, -inf
      %881 = vmax.xlane.f32.xlu0 %v880
      %v882 = vpop.xlane.xlu0 %881
      %v883 = vrot.slane %v882, 4
      %v884 = vadd.f32 %v882, %v883
      %v885 = vrot.slane %v884, 2
      %v886 = vadd.f32 %v884, %v885
      %v887 = vrot.slane %v886, 1
      %v888 = vadd.f32 %v886, %v887
      %v889 = vrcp.pop 8.0
      %v890 = vmul.f32 %v888, %v889
      %v891 = vrot.slane %v880, 4
      %v892 = vmax.f32 %v880, %v891
      %v893 = vrot.slane %v892, 2
      %v894 = vmax.f32 %v892, %v893
      %v895 = vrot.slane %v894, 1
      %v896 = vmax.f32 %v894, %v895
      %v897 = vsel %vm879, %v896, 0.0
      %898 = vadd.xlane.f32.xlu0 %v897
      %v899 = vpop.xlane.xlu0 %898
      %v900 = vmul.f32 %v899, %v889
      %v901 = vmul.f32 %v890, 2.0
      %v902 = vmul.f32 %v901, %v900
      %v903 = vadd.f32 %v890, %v900
      %v904 = vadd.f32 %v903, 1e-12
      %v905 = vrcp.pop %v904
      %v906 = vmul.f32 %v902, %v905
      %v907 = vsub.f32 %v906, 0.83
      %v908 = vmul.f32 %v907, 5.882353
      %v909 = vstv %s803
      %vm910 = vcmp.eq.s32.totalorder %v801, %v909
      %v911 = vsel %vm910, %v908, %v808
    $region22: #{tpu_custom_call.1} parent=1 // loop_footer
      %s807 = sadd.s32 1, %s803
    $region23: #{tpu_custom_call.1} parent=1 // loop_footer_branch
      %802 = sbr.rel target = $region19
    $region24: #{tpu_custom_call.1} parent=1 // loop_exit
      _
    %912 = vst [vmem:[#allocation9] sm:$0xff] %v808
    // Predicated region
    $region25: #{tpu_custom_call.1} parent=1 // pred_check
      _
    $region26: #{tpu_custom_call.1} parent=1 // pred_check_branch
      %914 = sbr.rel (0) target = $region28
    $region27: #{tpu_custom_call.1} parent=1 // pred_region
      %s916 = ssub.s32 128, 128
      %917 = vsyncadd [#allocation6], %s916
      %s919 = sshll.u32 [#allocation9], 4
      %s920 = int_to_ptr.vmem [resolvable:$true] %s919
      %922 = dma.vmem_to_hbm [thread:$0]  %s920, 128, %s2, [#allocation6]
    $region28: #{tpu_custom_call.1} parent=1 // pred_fallthru
      _
    // Predicated region
    $region29: #{tpu_custom_call.1} parent=1 // pred_check
      _
    $region30: #{tpu_custom_call.1} parent=1 // pred_check_branch
      %924 = sbr.rel (0) target = $region32
    $region31: #{tpu_custom_call.1} parent=1 // pred_region
      %925 = dma.done [#allocation6], 128
    $region32: #{tpu_custom_call.1} parent=1 // pred_fallthru
      _
    %926 = vsyncpa [#allocation5], 1
    %927 = vsyncpa [#allocation8], 1
    %928 = vsyncpa [#allocation6], 1

</llo_original>
